<compile_context>
chip_gen: v7x
topology: tpu7x:2x2x1
jax: 0.10.0
libtpu: 0.0.40
codegen_flags: <defaults>
</compile_context>

<pallas_src>
import functools

import jax
import jax.numpy as jnp
from jax.experimental import pallas as pl
from jax.experimental.pallas import tpu as pltpu

EPS = 1e-8
KSIZE = 5


# --------------------------------- kernel ---------------------------------- #
def ffn_kernel(x_ref, w1_ref, w2_ref, w3_ref, vec2c_ref, vecc_ref, alpha_ref,
               o_ref, *, matmul_dtype=None):
    x = x_ref[0]                                   # (C, T), lanes = T
    t = x.shape[1]

    def mdot(w, v):
        if matmul_dtype is not None:               # bf16 operands on v6e/v7x
            w = w.astype(matmul_dtype)
            v = v.astype(matmul_dtype)
        return jnp.dot(w, v, preferred_element_type=jnp.float32)

    def gln(y, gamma, beta):
        # two-pass (mean-shifted) variance: matches reference, no cancellation;
        # the centered slab `d` is reused for the normalization itself.
        mean = jnp.mean(y)
        d = y - mean
        var = jnp.mean(d * d)
        rstd = jax.lax.rsqrt(var + EPS)
        return gamma * (d * rstd) + beta

    def prelu(y, a):
        return jnp.where(y > 0, y, a * y)

    # PReLU slopes from SMEM (scalars)
    a1 = alpha_ref[0]
    a2 = alpha_ref[1]
    a3 = alpha_ref[2]

    # packed per-channel bias / gamma / beta
    b1, g1, be1 = vec2c_ref[:, 0:1], vec2c_ref[:, 1:2], vec2c_ref[:, 2:3]
    b2, g2, be2 = vec2c_ref[:, 3:4], vec2c_ref[:, 4:5], vec2c_ref[:, 5:6]
    b3, g3, be3 = vecc_ref[:, 0:1], vecc_ref[:, 1:2], vecc_ref[:, 2:3]

    # ---- conv1: 1x1 pointwise C -> 2C, one MXU matmul over the slab ----
    y = mdot(w1_ref[...], x) + b1
    y = prelu(gln(y, g1, be1), a1)

    # ---- conv2: depthwise k=5, 'same' zero padding, XLU rolls + edge masks ---
    w2 = w2_ref[...]                               # (2C, KSIZE)
    pos = jax.lax.broadcasted_iota(jnp.int32, (1, t), 1)
    half = KSIZE // 2
    z = jnp.zeros_like(y)
    for k in range(KSIZE):                         # static unroll (5 taps)
        wk = w2[:, k:k + 1]                        # (2C, 1), bound once per tap
        off = k - half                             # out[:, j] uses y[:, j + off]
        shift = (-off) % t
        rolled = pltpu.roll(y, shift, 1) if shift else y
        if off == 0:
            z = z + wk * rolled                    # center tap: mask all-ones
        elif off < 0:
            m = (pos >= -off).astype(jnp.float32)  # zero-pad left boundary
            z = z + wk * (rolled * m)
        else:
            m = (pos < t - off).astype(jnp.float32)  # zero-pad right boundary
            z = z + wk * (rolled * m)
    z = z + b2
    z = prelu(gln(z, g2, be2), a2)

    # ---- conv3: 1x1 pointwise 2C -> C ----
    u = mdot(w3_ref[...], z) + b3
    u = prelu(gln(u, g3, be3), a3)

    # ---- residual ----
    o_ref[0] = (u + x).astype(o_ref.dtype)


# --------------------------------- wrapper --------------------------------- #
def ffn_forward(x, params, matmul_dtype=None):
    """x: (B, C, T) NCL, processed in its natural layout (no HBM repack).

    Lane width per grid step is T; T % 128 == 0 keeps output stores unmasked
    and DMA lane-dense (preferred; T != multiple of 128 still works since the
    block covers the full T extent).
    matmul_dtype=jnp.bfloat16 enables bf16 matmul operands (v6e/v7x); stats
    stay f32 either way.
    """
    B, C, T = x.shape
    C2 = 2 * C

    # pack the 12 tiny per-channel params into 2 arrays, slopes into 1 SMEM vec
    vec2c = jnp.concatenate(
        [params["b1"], params["g1"], params["be1"],
         params["b2"], params["g2"], params["be2"]], axis=1)           # (2C, 6)
    vecc = jnp.concatenate(
        [params["b3"], params["g3"], params["be3"]], axis=1)           # (C, 3)
    alphas = jnp.concatenate(
        [params["a1"].reshape(-1), params["a2"].reshape(-1),
         params["a3"].reshape(-1)])                                    # (3,)

    flops = 2 * B * T * (C2 * C + C2 * KSIZE + C * C2)
    bytes_accessed = 4 * (2 * B * C * T + C2 * C + C * C2 + C2 * KSIZE
                          + C2 * 6 + C * 3 + 3)

    kernel = functools.partial(ffn_kernel, matmul_dtype=matmul_dtype)

    in_specs = [
        pl.BlockSpec((1, C, T), lambda b: (b, 0, 0)),             # x sample
        pl.BlockSpec((C2, C), lambda b: (0, 0)),                  # w1
        pl.BlockSpec((C2, KSIZE), lambda b: (0, 0)),              # w2 (depthwise)
        pl.BlockSpec((C, C2), lambda b: (0, 0)),                  # w3
        pl.BlockSpec((C2, 6), lambda b: (0, 0)),                  # b/g/be conv1+2
        pl.BlockSpec((C, 3), lambda b: (0, 0)),                   # b/g/be conv3
        pl.BlockSpec(memory_space=pltpu.MemorySpace.SMEM),        # PReLU slopes
    ]

    return pl.pallas_call(
        kernel,
        out_shape=jax.ShapeDtypeStruct((B, C, T), x.dtype),
        grid_spec=pltpu.PrefetchScalarGridSpec(
            num_scalar_prefetch=0,
            grid=(B,),
            in_specs=in_specs,
            out_specs=pl.BlockSpec((1, C, T), lambda b: (b, 0, 0)),
        ),
        compiler_params=pltpu.CompilerParams(
            dimension_semantics=("parallel",)),
        cost_estimate=pl.CostEstimate(
            flops=flops, transcendentals=3 * B, bytes_accessed=bytes_accessed),
    )(x, params["w1"], params["w2"], params["w3"], vec2c, vecc, alphas)


# ----------------------------- pure-JAX reference --------------------------- #
def ffn_ref(x, p):
    def gln(y, g, b):
        mean = jnp.mean(y)
        var = jnp.mean((y - mean) ** 2)
        return g * (y - mean) / jnp.sqrt(var + EPS) + b

    def prelu(y, a):
        return jnp.where(y > 0, y, a * y)

    def one(xb):                                             # xb: (C, T)
        C, T = xb.shape
        y = p["w1"] @ xb + p["b1"]
        y = prelu(gln(y, p["g1"], p["be1"]), p["a1"][0, 0])
        ypad = jnp.pad(y, ((0, 0), (2, 2)))
        z = sum(p["w2"][:, k:k + 1] * ypad[:, k:k + T] for k in range(KSIZE))
        z = z + p["b2"]
        z = prelu(gln(z, p["g2"], p["be2"]), p["a2"][0, 0])
        u = p["w3"] @ z + p["b3"]
        u = prelu(gln(u, p["g3"], p["be3"]), p["a3"][0, 0])
        return u + xb

    return jax.vmap(one)(x)


# ----------------------------------- main ----------------------------------- #
if __name__ == "__main__":
    B, C, T = 2, 16, 128                                     # embed_dim=16, lane-dense T
    C2 = 2 * C

    key = jax.random.PRNGKey(0)
    ks = jax.random.split(key, 8)

    x = jax.random.normal(ks[0], (B, C, T), jnp.float32)

    params = {
        # conv1: 1x1, C -> 2C
        "w1": jax.random.normal(ks[1], (C2, C), jnp.float32) * 0.1,
        "b1": jax.random.normal(ks[2], (C2, 1), jnp.float32) * 0.1,
        "g1": jnp.ones((C2, 1), jnp.float32),
        "be1": jnp.zeros((C2, 1), jnp.float32),
        "a1": jnp.full((1, 1), 0.25, jnp.float32),
        # conv2: depthwise k=5 on 2C channels
        "w2": jax.random.normal(ks[3], (C2, KSIZE), jnp.float32) * 0.1,
        "b2": jax.random.normal(ks[4], (C2, 1), jnp.float32) * 0.1,
        "g2": jnp.ones((C2, 1), jnp.float32),
        "be2": jnp.zeros((C2, 1), jnp.float32),
        "a2": jnp.full((1, 1), 0.25, jnp.float32),
        # conv3: 1x1, 2C -> C
        "w3": jax.random.normal(ks[5], (C, C2), jnp.float32) * 0.1,
        "b3": jax.random.normal(ks[6], (C, 1), jnp.float32) * 0.1,
        "g3": jnp.ones((C, 1), jnp.float32),
        "be3": jnp.zeros((C, 1), jnp.float32),
        "a3": jnp.full((1, 1), 0.25, jnp.float32),
    }

    out = jax.block_until_ready(ffn_forward(x, params))
    ref = ffn_ref(x, params)

    assert out.shape == (B, C, T)
    assert jnp.allclose(out, ref, atol=1e-4, rtol=1e-4), "mismatch vs reference"

    print("KERNEL_OK")
</pallas_src>

<mosaic_0001>
module attributes {stable_mosaic.version = 11 : i64} {
  func.func @ffn_kernel(%arg0: i32, %arg1: memref<1x16x128xf32, #tpu.memory_space<vmem>>, %arg2: memref<32x16xf32, #tpu.memory_space<vmem>>, %arg3: memref<32x5xf32, #tpu.memory_space<vmem>>, %arg4: memref<16x32xf32, #tpu.memory_space<vmem>>, %arg5: memref<32x6xf32, #tpu.memory_space<vmem>>, %arg6: memref<16x3xf32, #tpu.memory_space<vmem>>, %arg7: memref<3xf32, #tpu.memory_space<smem>>, %arg8: memref<1x16x128xf32, #tpu.memory_space<vmem>>) attributes {dimension_semantics = [#tpu.dimension_semantics<parallel>], iteration_bounds = array<i64: 2>, scalar_prefetch = 0 : i64, scratch_operands = 0 : i64, tpu.core_type = #tpu.core_type<tc>, window_params = [{transform_indices = @transform_0, window_bounds = array<i64: 1, 16, 128>}, {pipeline_mode = #tpu.pipeline_mode<synchronous>, transform_indices = @transform_1, window_bounds = array<i64: 32, 16>}, {pipeline_mode = #tpu.pipeline_mode<synchronous>, transform_indices = @transform_2, window_bounds = array<i64: 32, 5>}, {pipeline_mode = #tpu.pipeline_mode<synchronous>, transform_indices = @transform_3, window_bounds = array<i64: 16, 32>}, {pipeline_mode = #tpu.pipeline_mode<synchronous>, transform_indices = @transform_4, window_bounds = array<i64: 32, 6>}, {pipeline_mode = #tpu.pipeline_mode<synchronous>, transform_indices = @transform_5, window_bounds = array<i64: 16, 3>}, {transform_indices = @transform_6, window_bounds = array<i64: 3>}, {transform_indices = @transform_7, window_bounds = array<i64: 1, 16, 128>}]} {
    %c0 = arith.constant 0 : index
    %c0_0 = arith.constant 0 : index
    %c0_1 = arith.constant 0 : index
    %0 = vector.load %arg1[%c0, %c0_0, %c0_1] : memref<1x16x128xf32, #tpu.memory_space<vmem>>, vector<1x16x128xf32>
    %1 = vector.shape_cast %0 : vector<1x16x128xf32> to vector<16x128xf32>
    %c0_2 = arith.constant 0 : index
    %2 = memref.load %arg7[%c0_2] : memref<3xf32, #tpu.memory_space<smem>>
    %c1 = arith.constant 1 : index
    %3 = memref.load %arg7[%c1] : memref<3xf32, #tpu.memory_space<smem>>
    %c2 = arith.constant 2 : index
    %4 = memref.load %arg7[%c2] : memref<3xf32, #tpu.memory_space<smem>>
    %c0_3 = arith.constant 0 : index
    %c0_4 = arith.constant 0 : index
    %5 = vector.load %arg5[%c0_3, %c0_4] : memref<32x6xf32, #tpu.memory_space<vmem>>, vector<32x1xf32>
    %c0_5 = arith.constant 0 : index
    %c1_6 = arith.constant 1 : index
    %6 = vector.load %arg5[%c0_5, %c1_6] : memref<32x6xf32, #tpu.memory_space<vmem>>, vector<32x1xf32>
    %c0_7 = arith.constant 0 : index
    %c2_8 = arith.constant 2 : index
    %7 = vector.load %arg5[%c0_7, %c2_8] : memref<32x6xf32, #tpu.memory_space<vmem>>, vector<32x1xf32>
    %c0_9 = arith.constant 0 : index
    %c3 = arith.constant 3 : index
    %8 = vector.load %arg5[%c0_9, %c3] : memref<32x6xf32, #tpu.memory_space<vmem>>, vector<32x1xf32>
    %c0_10 = arith.constant 0 : index
    %c4 = arith.constant 4 : index
    %9 = vector.load %arg5[%c0_10, %c4] : memref<32x6xf32, #tpu.memory_space<vmem>>, vector<32x1xf32>
    %c0_11 = arith.constant 0 : index
    %c5 = arith.constant 5 : index
    %10 = vector.load %arg5[%c0_11, %c5] : memref<32x6xf32, #tpu.memory_space<vmem>>, vector<32x1xf32>
    %c0_12 = arith.constant 0 : index
    %c0_13 = arith.constant 0 : index
    %11 = vector.load %arg6[%c0_12, %c0_13] : memref<16x3xf32, #tpu.memory_space<vmem>>, vector<16x1xf32>
    %c0_14 = arith.constant 0 : index
    %c1_15 = arith.constant 1 : index
    %12 = vector.load %arg6[%c0_14, %c1_15] : memref<16x3xf32, #tpu.memory_space<vmem>>, vector<16x1xf32>
    %c0_16 = arith.constant 0 : index
    %c2_17 = arith.constant 2 : index
    %13 = vector.load %arg6[%c0_16, %c2_17] : memref<16x3xf32, #tpu.memory_space<vmem>>, vector<16x1xf32>
    %c0_18 = arith.constant 0 : index
    %c0_19 = arith.constant 0 : index
    %14 = vector.load %arg2[%c0_18, %c0_19] : memref<32x16xf32, #tpu.memory_space<vmem>>, vector<32x16xf32>
    %cst = arith.constant dense<0.000000e+00> : vector<32x128xf32>
    %15 = tpu.matmul %14, %1, %cst {dimension_numbers = #tpu.dot_dimension_numbers<[1], [0], [0], [1], [0, 0, 1, 1], [], []>} : vector<32x16xf32>, vector<16x128xf32>, vector<32x128xf32> -> vector<32x128xf32>
    %16 = vector.broadcast %5 : vector<32x1xf32> to vector<32x128xf32>
    %17 = arith.addf %15, %16 : vector<32x128xf32>
    %18 = vector.shape_cast %17 : vector<32x128xf32> to vector<1x32x128xf32>
    %cst_20 = arith.constant dense<0.000000e+00> : vector<1xf32>
    %19 = vector.multi_reduction <add>, %18, %cst_20 [1, 2] : vector<1x32x128xf32> to vector<1xf32>
    %20 = vector.shape_cast %19 : vector<1xf32> to vector<1x1x1xf32>
    %21 = vector.extract %20[0, 0, 0] : f32 from vector<1x1x1xf32>
    %cst_21 = arith.constant 4.096000e+03 : f32
    %22 = arith.divf %21, %cst_21 : f32
    %23 = vector.broadcast %22 : f32 to vector<32x128xf32>
    %24 = arith.subf %17, %23 : vector<32x128xf32>
    %25 = arith.mulf %24, %24 : vector<32x128xf32>
    %26 = vector.shape_cast %25 : vector<32x128xf32> to vector<1x32x128xf32>
    %cst_22 = arith.constant dense<0.000000e+00> : vector<1xf32>
    %27 = vector.multi_reduction <add>, %26, %cst_22 [1, 2] : vector<1x32x128xf32> to vector<1xf32>
    %28 = vector.shape_cast %27 : vector<1xf32> to vector<1x1x1xf32>
    %29 = vector.extract %28[0, 0, 0] : f32 from vector<1x1x1xf32>
    %cst_23 = arith.constant 4.096000e+03 : f32
    %30 = arith.divf %29, %cst_23 : f32
    %cst_24 = arith.constant 9.99999993E-9 : f32
    %31 = arith.addf %30, %cst_24 : f32
    %32 = math.rsqrt %31 : f32
    %33 = vector.broadcast %32 : f32 to vector<32x128xf32>
    %34 = arith.mulf %24, %33 : vector<32x128xf32>
    %35 = vector.broadcast %6 : vector<32x1xf32> to vector<32x128xf32>
    %36 = arith.mulf %35, %34 : vector<32x128xf32>
    %37 = vector.broadcast %7 : vector<32x1xf32> to vector<32x128xf32>
    %38 = arith.addf %36, %37 : vector<32x128xf32>
    %cst_25 = arith.constant 0.000000e+00 : f32
    %39 = vector.broadcast %cst_25 : f32 to vector<32x128xf32>
    %40 = arith.cmpf ogt, %38, %39 : vector<32x128xf32>
    %41 = vector.broadcast %2 : f32 to vector<32x128xf32>
    %42 = arith.mulf %41, %38 : vector<32x128xf32>
    %43 = arith.select %40, %38, %42 : vector<32x128xi1>, vector<32x128xf32>
    %c0_26 = arith.constant 0 : index
    %c0_27 = arith.constant 0 : index
    %44 = vector.load %arg3[%c0_26, %c0_27] : memref<32x5xf32, #tpu.memory_space<vmem>>, vector<32x5xf32>
    %45 = tpu.iota {dimensions = array<i32: 1>} : vector<1x128xi32>
    %cst_28 = arith.constant 0.000000e+00 : f32
    %46 = vector.broadcast %cst_28 : f32 to vector<32x128xf32>
    %47 = vector.extract_strided_slice %44 {offsets = [0, 0], sizes = [32, 1], strides = [1, 1]} : vector<32x5xf32> to vector<32x1xf32>
    %c2_i32 = arith.constant 2 : i32
    %48 = tpu.dynamic_rotate %43 by %c2_i32 dim 1 : vector<32x128xf32>, i32 -> vector<32x128xf32>
    %c2_i32_29 = arith.constant 2 : i32
    %49 = vector.broadcast %c2_i32_29 : i32 to vector<1x128xi32>
    %50 = arith.cmpi sge, %45, %49 : vector<1x128xi32>
    %51 = arith.extui %50 : vector<1x128xi1> to vector<1x128xi32>
    %52 = arith.sitofp %51 : vector<1x128xi32> to vector<1x128xf32>
    %53 = vector.broadcast %52 : vector<1x128xf32> to vector<32x128xf32>
    %54 = arith.mulf %48, %53 : vector<32x128xf32>
    %55 = vector.broadcast %47 : vector<32x1xf32> to vector<32x128xf32>
    %56 = arith.mulf %55, %54 : vector<32x128xf32>
    %57 = arith.addf %46, %56 : vector<32x128xf32>
    %58 = vector.extract_strided_slice %44 {offsets = [0, 1], sizes = [32, 1], strides = [1, 1]} : vector<32x5xf32> to vector<32x1xf32>
    %c1_i32 = arith.constant 1 : i32
    %59 = tpu.dynamic_rotate %43 by %c1_i32 dim 1 : vector<32x128xf32>, i32 -> vector<32x128xf32>
    %c1_i32_30 = arith.constant 1 : i32
    %60 = vector.broadcast %c1_i32_30 : i32 to vector<1x128xi32>
    %61 = arith.cmpi sge, %45, %60 : vector<1x128xi32>
    %62 = arith.extui %61 : vector<1x128xi1> to vector<1x128xi32>
    %63 = arith.sitofp %62 : vector<1x128xi32> to vector<1x128xf32>
    %64 = vector.broadcast %63 : vector<1x128xf32> to vector<32x128xf32>
    %65 = arith.mulf %59, %64 : vector<32x128xf32>
    %66 = vector.broadcast %58 : vector<32x1xf32> to vector<32x128xf32>
    %67 = arith.mulf %66, %65 : vector<32x128xf32>
    %68 = arith.addf %57, %67 : vector<32x128xf32>
    %69 = vector.extract_strided_slice %44 {offsets = [0, 2], sizes = [32, 1], strides = [1, 1]} : vector<32x5xf32> to vector<32x1xf32>
    %70 = vector.broadcast %69 : vector<32x1xf32> to vector<32x128xf32>
    %71 = arith.mulf %70, %43 : vector<32x128xf32>
    %72 = arith.addf %68, %71 : vector<32x128xf32>
    %73 = vector.extract_strided_slice %44 {offsets = [0, 3], sizes = [32, 1], strides = [1, 1]} : vector<32x5xf32> to vector<32x1xf32>
    %c127_i32 = arith.constant 127 : i32
    %74 = tpu.dynamic_rotate %43 by %c127_i32 dim 1 : vector<32x128xf32>, i32 -> vector<32x128xf32>
    %c127_i32_31 = arith.constant 127 : i32
    %75 = vector.broadcast %c127_i32_31 : i32 to vector<1x128xi32>
    %76 = arith.cmpi slt, %45, %75 : vector<1x128xi32>
    %77 = arith.extui %76 : vector<1x128xi1> to vector<1x128xi32>
    %78 = arith.sitofp %77 : vector<1x128xi32> to vector<1x128xf32>
    %79 = vector.broadcast %78 : vector<1x128xf32> to vector<32x128xf32>
    %80 = arith.mulf %74, %79 : vector<32x128xf32>
    %81 = vector.broadcast %73 : vector<32x1xf32> to vector<32x128xf32>
    %82 = arith.mulf %81, %80 : vector<32x128xf32>
    %83 = arith.addf %72, %82 : vector<32x128xf32>
    %84 = vector.extract_strided_slice %44 {offsets = [0, 4], sizes = [32, 1], strides = [1, 1]} : vector<32x5xf32> to vector<32x1xf32>
    %c126_i32 = arith.constant 126 : i32
    %85 = tpu.dynamic_rotate %43 by %c126_i32 dim 1 : vector<32x128xf32>, i32 -> vector<32x128xf32>
    %c126_i32_32 = arith.constant 126 : i32
    %86 = vector.broadcast %c126_i32_32 : i32 to vector<1x128xi32>
    %87 = arith.cmpi slt, %45, %86 : vector<1x128xi32>
    %88 = arith.extui %87 : vector<1x128xi1> to vector<1x128xi32>
    %89 = arith.sitofp %88 : vector<1x128xi32> to vector<1x128xf32>
    %90 = vector.broadcast %89 : vector<1x128xf32> to vector<32x128xf32>
    %91 = arith.mulf %85, %90 : vector<32x128xf32>
    %92 = vector.broadcast %84 : vector<32x1xf32> to vector<32x128xf32>
    %93 = arith.mulf %92, %91 : vector<32x128xf32>
    %94 = arith.addf %83, %93 : vector<32x128xf32>
    %95 = vector.broadcast %8 : vector<32x1xf32> to vector<32x128xf32>
    %96 = arith.addf %94, %95 : vector<32x128xf32>
    %97 = vector.shape_cast %96 : vector<32x128xf32> to vector<1x32x128xf32>
    %cst_33 = arith.constant dense<0.000000e+00> : vector<1xf32>
    %98 = vector.multi_reduction <add>, %97, %cst_33 [1, 2] : vector<1x32x128xf32> to vector<1xf32>
    %99 = vector.shape_cast %98 : vector<1xf32> to vector<1x1x1xf32>
    %100 = vector.extract %99[0, 0, 0] : f32 from vector<1x1x1xf32>
    %cst_34 = arith.constant 4.096000e+03 : f32
    %101 = arith.divf %100, %cst_34 : f32
    %102 = vector.broadcast %101 : f32 to vector<32x128xf32>
    %103 = arith.subf %96, %102 : vector<32x128xf32>
    %104 = arith.mulf %103, %103 : vector<32x128xf32>
    %105 = vector.shape_cast %104 : vector<32x128xf32> to vector<1x32x128xf32>
    %cst_35 = arith.constant dense<0.000000e+00> : vector<1xf32>
    %106 = vector.multi_reduction <add>, %105, %cst_35 [1, 2] : vector<1x32x128xf32> to vector<1xf32>
    %107 = vector.shape_cast %106 : vector<1xf32> to vector<1x1x1xf32>
    %108 = vector.extract %107[0, 0, 0] : f32 from vector<1x1x1xf32>
    %cst_36 = arith.constant 4.096000e+03 : f32
    %109 = arith.divf %108, %cst_36 : f32
    %cst_37 = arith.constant 9.99999993E-9 : f32
    %110 = arith.addf %109, %cst_37 : f32
    %111 = math.rsqrt %110 : f32
    %112 = vector.broadcast %111 : f32 to vector<32x128xf32>
    %113 = arith.mulf %103, %112 : vector<32x128xf32>
    %114 = vector.broadcast %9 : vector<32x1xf32> to vector<32x128xf32>
    %115 = arith.mulf %114, %113 : vector<32x128xf32>
    %116 = vector.broadcast %10 : vector<32x1xf32> to vector<32x128xf32>
    %117 = arith.addf %115, %116 : vector<32x128xf32>
    %cst_38 = arith.constant 0.000000e+00 : f32
    %118 = vector.broadcast %cst_38 : f32 to vector<32x128xf32>
    %119 = arith.cmpf ogt, %117, %118 : vector<32x128xf32>
    %120 = vector.broadcast %3 : f32 to vector<32x128xf32>
    %121 = arith.mulf %120, %117 : vector<32x128xf32>
    %122 = arith.select %119, %117, %121 : vector<32x128xi1>, vector<32x128xf32>
    %c0_39 = arith.constant 0 : index
    %c0_40 = arith.constant 0 : index
    %123 = vector.load %arg4[%c0_39, %c0_40] : memref<16x32xf32, #tpu.memory_space<vmem>>, vector<16x32xf32>
    %cst_41 = arith.constant dense<0.000000e+00> : vector<16x128xf32>
    %124 = tpu.matmul %123, %122, %cst_41 {dimension_numbers = #tpu.dot_dimension_numbers<[1], [0], [0], [1], [0, 0, 1, 1], [], []>} : vector<16x32xf32>, vector<32x128xf32>, vector<16x128xf32> -> vector<16x128xf32>
    %125 = vector.broadcast %11 : vector<16x1xf32> to vector<16x128xf32>
    %126 = arith.addf %124, %125 : vector<16x128xf32>
    %127 = vector.shape_cast %126 : vector<16x128xf32> to vector<1x16x128xf32>
    %cst_42 = arith.constant dense<0.000000e+00> : vector<1xf32>
    %128 = vector.multi_reduction <add>, %127, %cst_42 [1, 2] : vector<1x16x128xf32> to vector<1xf32>
    %129 = vector.shape_cast %128 : vector<1xf32> to vector<1x1x1xf32>
    %130 = vector.extract %129[0, 0, 0] : f32 from vector<1x1x1xf32>
    %cst_43 = arith.constant 2.048000e+03 : f32
    %131 = arith.divf %130, %cst_43 : f32
    %132 = vector.broadcast %131 : f32 to vector<16x128xf32>
    %133 = arith.subf %126, %132 : vector<16x128xf32>
    %134 = arith.mulf %133, %133 : vector<16x128xf32>
    %135 = vector.shape_cast %134 : vector<16x128xf32> to vector<1x16x128xf32>
    %cst_44 = arith.constant dense<0.000000e+00> : vector<1xf32>
    %136 = vector.multi_reduction <add>, %135, %cst_44 [1, 2] : vector<1x16x128xf32> to vector<1xf32>
    %137 = vector.shape_cast %136 : vector<1xf32> to vector<1x1x1xf32>
    %138 = vector.extract %137[0, 0, 0] : f32 from vector<1x1x1xf32>
    %cst_45 = arith.constant 2.048000e+03 : f32
    %139 = arith.divf %138, %cst_45 : f32
    %cst_46 = arith.constant 9.99999993E-9 : f32
    %140 = arith.addf %139, %cst_46 : f32
    %141 = math.rsqrt %140 : f32
    %142 = vector.broadcast %141 : f32 to vector<16x128xf32>
    %143 = arith.mulf %133, %142 : vector<16x128xf32>
    %144 = vector.broadcast %12 : vector<16x1xf32> to vector<16x128xf32>
    %145 = arith.mulf %144, %143 : vector<16x128xf32>
    %146 = vector.broadcast %13 : vector<16x1xf32> to vector<16x128xf32>
    %147 = arith.addf %145, %146 : vector<16x128xf32>
    %cst_47 = arith.constant 0.000000e+00 : f32
    %148 = vector.broadcast %cst_47 : f32 to vector<16x128xf32>
    %149 = arith.cmpf ogt, %147, %148 : vector<16x128xf32>
    %150 = vector.broadcast %4 : f32 to vector<16x128xf32>
    %151 = arith.mulf %150, %147 : vector<16x128xf32>
    %152 = arith.select %149, %147, %151 : vector<16x128xi1>, vector<16x128xf32>
    %153 = arith.addf %152, %1 : vector<16x128xf32>
    %c0_48 = arith.constant 0 : index
    %c0_49 = arith.constant 0 : index
    %c0_50 = arith.constant 0 : index
    %154 = vector.load %arg8[%c0_48, %c0_49, %c0_50] : memref<1x16x128xf32, #tpu.memory_space<vmem>>, vector<1x16x128xf32>
    %155 = vector.shape_cast %154 : vector<1x16x128xf32> to vector<16x128xf32>
    %156 = vector.shape_cast %153 : vector<16x128xf32> to vector<1x16x128xf32>
    tpu.vector_store %arg8[%c0_48, %c0_49, %c0_50], %156 {strides = array<i32>} : memref<1x16x128xf32, #tpu.memory_space<vmem>>, vector<1x16x128xf32>,
    return
  }
  func.func @transform_0(%arg0: i32) -> (i32, i32, i32) {
    %c0_i32 = arith.constant 0 : i32
    %c0_i32_0 = arith.constant 0 : i32
    %c0_i32_1 = arith.constant 0 : i32
    return %arg0, %c0_i32, %c0_i32_0 : i32, i32, i32
  }
  func.func @transform_1(%arg0: i32) -> (i32, i32) {
    %c0_i32 = arith.constant 0 : i32
    %c0_i32_0 = arith.constant 0 : i32
    %c0_i32_1 = arith.constant 0 : i32
    return %c0_i32, %c0_i32_0 : i32, i32
  }
  func.func @transform_2(%arg0: i32) -> (i32, i32) {
    %c0_i32 = arith.constant 0 : i32
    %c0_i32_0 = arith.constant 0 : i32
    %c0_i32_1 = arith.constant 0 : i32
    return %c0_i32, %c0_i32_0 : i32, i32
  }
  func.func @transform_3(%arg0: i32) -> (i32, i32) {
    %c0_i32 = arith.constant 0 : i32
    %c0_i32_0 = arith.constant 0 : i32
    %c0_i32_1 = arith.constant 0 : i32
    return %c0_i32, %c0_i32_0 : i32, i32
  }
  func.func @transform_4(%arg0: i32) -> (i32, i32) {
    %c0_i32 = arith.constant 0 : i32
    %c0_i32_0 = arith.constant 0 : i32
    %c0_i32_1 = arith.constant 0 : i32
    return %c0_i32, %c0_i32_0 : i32, i32
  }
  func.func @transform_5(%arg0: i32) -> (i32, i32) {
    %c0_i32 = arith.constant 0 : i32
    %c0_i32_0 = arith.constant 0 : i32
    %c0_i32_1 = arith.constant 0 : i32
    return %c0_i32, %c0_i32_0 : i32, i32
  }
  func.func @transform_6(%arg0: i32) -> i32 {
    %c0_i32 = arith.constant 0 : i32
    %c0_i32_0 = arith.constant 0 : i32
    return %c0_i32 : i32
  }
  func.func @transform_7(%arg0: i32) -> (i32, i32, i32) {
    %c0_i32 = arith.constant 0 : i32
    %c0_i32_0 = arith.constant 0 : i32
    %c0_i32_1 = arith.constant 0 : i32
    return %arg0, %c0_i32, %c0_i32_0 : i32, i32, i32
  }
}

</mosaic_0001>

<llo_original>
// kernel: tpu_custom_call.1
$region0: #{tpu_custom_call.1}
  #allocation0 [shape = 'u32[]', space=smem, size = 0x4, offset = 0x4, fixed_abs, tag = 'smem constant byte address 0x4 - core index']
  #allocation1 [shape = 'u32[144,128]{1,0:T(1,128)}', space=vmem, size = 0x12000, scoped, tag = 'internal scratch']
  %s0 = inlined_call_operand.vmem [shape: f32[2,16,128], index: 0, kind: input, shape index: {}]
  %s1 = inlined_call_operand.vmem [shape: f32[32,16], index: 1, kind: input, shape index: {}]
  %s2 = inlined_call_operand.vmem [shape: f32[32,5], index: 2, kind: input, shape index: {}]
  %s3 = inlined_call_operand.vmem [shape: f32[16,32], index: 3, kind: input, shape index: {}]
  %s4 = inlined_call_operand.vmem [shape: f32[32,6], index: 4, kind: input, shape index: {}]
  %s5 = inlined_call_operand.vmem [shape: f32[16,3], index: 5, kind: input, shape index: {}]
  %s6 = inlined_call_operand.vmem [shape: f32[3], index: 6, kind: input, shape index: {}]
  %s7 = inlined_call_operand.hbm [shape: f32[2,16,128], index: 7, kind: output, shape index: {}]
  %s8 = sld [smem:[#allocation0]]
  $region65: #{tpu_custom_call.1} parent=0
    _
  %s10 = ssub.s32 1, %s8
  %s11 = scalar_select 0, %s10, %s8
  $region1: #{tpu_custom_call.1} parent=0
    #allocation2 [shape = 'u8[512]{0}', space=smem, size = 0x200, scoped, tag = 'input window, operand 6, single buffered']
    #allocation3 [shape = 's32[2]{0}', space=sflag, size = 0x8, scoped, tag = 'scoped memory for tpu_custom_call.1']
    #allocation4 [shape = 's32[2]{0}', space=sflag, size = 0x8, scoped, tag = 'scoped memory for tpu_custom_call.1']
    #allocation5 [shape = 'u8[16384]{0}', space=vmem, size = 0x4000, scoped, tag = 'output window, operand 0']
    %12 = vsyncpa [#allocation4], 0
    %13 = vsyncpa [#allocation3], 0
    %s14 = scalar_lea.sflag [#allocation3], 1
    %15 = vsyncpa %s14, 0
    loop: start=0, step=1, limit=4
    $region2: #{tpu_custom_call.1} parent=1 // loop_pre_header
      _
    $region3: #{tpu_custom_call.1} parent=1 // loop_header
      %s17 = sphi 0, %s21
      %p18 = scmp.ge.s32.totalorder %s17, 4
      %s27 = sphi 0, %s29
      %s30 = sphi 0, %s27
      %s31 = sphi 0, %s30
      %s47 = sphi 0, %s31
      %s51 = sphi 0, %s51
      %s53 = sphi 0, %s51
      %s54 = sphi 0, %s53
      %s68 = sphi 0, %s54
      %s72 = sphi 0, %s72
      %s74 = sphi 0, %s72
      %s75 = sphi 0, %s74
      %s89 = sphi 0, %s75
      %s93 = sphi 0, %s93
      %s95 = sphi 0, %s93
      %s96 = sphi 0, %s95
      %s110 = sphi 0, %s96
      %s114 = sphi 0, %s114
      %s116 = sphi 0, %s114
      %s117 = sphi 0, %s116
      %s131 = sphi 0, %s117
      %s135 = sphi 0, %s135
      %s137 = sphi 0, %s135
      %s138 = sphi 0, %s137
      %s152 = sphi 0, %s138
      %s156 = sphi 0, %s156
      %s158 = sphi 0, %s156
      %s159 = sphi 0, %s158
      %s173 = sphi 0, %s159
      %s179 = sphi 0, %s181
      %s182 = sphi 0, %s179
      %s183 = sphi 0, %s182
      %s199 = sphi 0, %s183
    $region4: #{tpu_custom_call.1} parent=1 // loop_header_branch
      %20 = sbr.rel (%p18) target = $region8
    $region5: #{tpu_custom_call.1} parent=1 // loop_body
      %s22 = ssub.s32 %s17, 1
      %s23 = ssub.s32 %s17, 2
      %s24 = sadd.s32 %s17, 1
      %s25 = ssub.s32 %s17, %s24
      %p26 = scmp.eq.s32.totalorder %s25, 0
      %s28 = sadd.s32 %s27, 1
      %s29 = scalar_select %p26, %s27, %s28
      %p32 = pneg %p26
      %p33 = scmp.eq.s32.totalorder %s17, 1
      %p34 = por %p32, %p33
      %p35 = scmp.ne.s32.totalorder %s27, %s30
      %p36 = scmp.eq.s32.totalorder %s17, 0
      %p37 = por %p35, %p36
      %p38 = scmp.ne.s32.totalorder %s27, %s30
      %p39 = scmp.eq.s32.totalorder %s22, 1
      %p40 = por %p38, %p39
      %p41 = scmp.ne.s32.totalorder %s30, %s31
      %p42 = scmp.eq.s32.totalorder %s22, 0
      %p43 = por %p41, %p42
      %p44 = scmp.ne.s32.totalorder %s30, %s31
      %p45 = scmp.eq.s32.totalorder %s23, 1
      %p46 = por %p44, %p45
      %p48 = scmp.ne.s32.totalorder %s31, %s47
      %p49 = scmp.eq.s32.totalorder %s23, 0
      %p50 = por %p48, %p49
      %s52 = sadd.s32 %s51, 1
      %p55 = scmp.eq.s32.totalorder %s17, 1
      %p56 = scmp.ne.s32.totalorder %s51, %s53
      %p57 = scmp.eq.s32.totalorder %s17, 0
      %p58 = por %p56, %p57
      %p59 = scmp.ne.s32.totalorder %s51, %s53
      %p60 = scmp.eq.s32.totalorder %s22, 1
      %p61 = por %p59, %p60
      %p62 = scmp.ne.s32.totalorder %s53, %s54
      %p63 = scmp.eq.s32.totalorder %s22, 0
      %p64 = por %p62, %p63
      %p65 = scmp.ne.s32.totalorder %s53, %s54
      %p66 = scmp.eq.s32.totalorder %s23, 1
      %p67 = por %p65, %p66
      %p69 = scmp.ne.s32.totalorder %s54, %s68
      %p70 = scmp.eq.s32.totalorder %s23, 0
      %p71 = por %p69, %p70
      %s73 = sadd.s32 %s72, 1
      %p76 = scmp.eq.s32.totalorder %s17, 1
      %p77 = scmp.ne.s32.totalorder %s72, %s74
      %p78 = scmp.eq.s32.totalorder %s17, 0
      %p79 = por %p77, %p78
      %p80 = scmp.ne.s32.totalorder %s72, %s74
      %p81 = scmp.eq.s32.totalorder %s22, 1
      %p82 = por %p80, %p81
      %p83 = scmp.ne.s32.totalorder %s74, %s75
      %p84 = scmp.eq.s32.totalorder %s22, 0
      %p85 = por %p83, %p84
      %p86 = scmp.ne.s32.totalorder %s74, %s75
      %p87 = scmp.eq.s32.totalorder %s23, 1
      %p88 = por %p86, %p87
      %p90 = scmp.ne.s32.totalorder %s75, %s89
      %p91 = scmp.eq.s32.totalorder %s23, 0
      %p92 = por %p90, %p91
      %s94 = sadd.s32 %s93, 1
      %p97 = scmp.eq.s32.totalorder %s17, 1
      %p98 = scmp.ne.s32.totalorder %s93, %s95
      %p99 = scmp.eq.s32.totalorder %s17, 0
      %p100 = por %p98, %p99
      %p101 = scmp.ne.s32.totalorder %s93, %s95
      %p102 = scmp.eq.s32.totalorder %s22, 1
      %p103 = por %p101, %p102
      %p104 = scmp.ne.s32.totalorder %s95, %s96
      %p105 = scmp.eq.s32.totalorder %s22, 0
      %p106 = por %p104, %p105
      %p107 = scmp.ne.s32.totalorder %s95, %s96
      %p108 = scmp.eq.s32.totalorder %s23, 1
      %p109 = por %p107, %p108
      %p111 = scmp.ne.s32.totalorder %s96, %s110
      %p112 = scmp.eq.s32.totalorder %s23, 0
      %p113 = por %p111, %p112
      %s115 = sadd.s32 %s114, 1
      %p118 = scmp.eq.s32.totalorder %s17, 1
      %p119 = scmp.ne.s32.totalorder %s114, %s116
      %p120 = scmp.eq.s32.totalorder %s17, 0
      %p121 = por %p119, %p120
      %p122 = scmp.ne.s32.totalorder %s114, %s116
      %p123 = scmp.eq.s32.totalorder %s22, 1
      %p124 = por %p122, %p123
      %p125 = scmp.ne.s32.totalorder %s116, %s117
      %p126 = scmp.eq.s32.totalorder %s22, 0
      %p127 = por %p125, %p126
      %p128 = scmp.ne.s32.totalorder %s116, %s117
      %p129 = scmp.eq.s32.totalorder %s23, 1
      %p130 = por %p128, %p129
      %p132 = scmp.ne.s32.totalorder %s117, %s131
      %p133 = scmp.eq.s32.totalorder %s23, 0
      %p134 = por %p132, %p133
      %s136 = sadd.s32 %s135, 1
      %p139 = scmp.eq.s32.totalorder %s17, 1
      %p140 = scmp.ne.s32.totalorder %s135, %s137
      %p141 = scmp.eq.s32.totalorder %s17, 0
      %p142 = por %p140, %p141
      %p143 = scmp.ne.s32.totalorder %s135, %s137
      %p144 = scmp.eq.s32.totalorder %s22, 1
      %p145 = por %p143, %p144
      %p146 = scmp.ne.s32.totalorder %s137, %s138
      %p147 = scmp.eq.s32.totalorder %s22, 0
      %p148 = por %p146, %p147
      %p149 = scmp.ne.s32.totalorder %s137, %s138
      %p150 = scmp.eq.s32.totalorder %s23, 1
      %p151 = por %p149, %p150
      %p153 = scmp.ne.s32.totalorder %s138, %s152
      %p154 = scmp.eq.s32.totalorder %s23, 0
      %p155 = por %p153, %p154
      %s157 = sadd.s32 %s156, 1
      %p160 = scmp.eq.s32.totalorder %s17, 1
      %p161 = scmp.ne.s32.totalorder %s156, %s158
      %p162 = scmp.eq.s32.totalorder %s17, 0
      %p163 = por %p161, %p162
      %p164 = scmp.ne.s32.totalorder %s156, %s158
      %p165 = scmp.eq.s32.totalorder %s22, 1
      %p166 = por %p164, %p165
      %p167 = scmp.ne.s32.totalorder %s158, %s159
      %p168 = scmp.eq.s32.totalorder %s22, 0
      %p169 = por %p167, %p168
      %p170 = scmp.ne.s32.totalorder %s158, %s159
      %p171 = scmp.eq.s32.totalorder %s23, 1
      %p172 = por %p170, %p171
      %p174 = scmp.ne.s32.totalorder %s159, %s173
      %p175 = scmp.eq.s32.totalorder %s23, 0
      %p176 = por %p174, %p175
      %s177 = ssub.s32 %s17, %s24
      %p178 = scmp.eq.s32.totalorder %s177, 0
      %s180 = sadd.s32 %s179, 1
      %s181 = scalar_select %p178, %s179, %s180
      %p184 = pneg %p178
      %p185 = scmp.eq.s32.totalorder %s17, 1
      %p186 = por %p184, %p185
      %p187 = scmp.ne.s32.totalorder %s179, %s182
      %p188 = scmp.eq.s32.totalorder %s17, 0
      %p189 = por %p187, %p188
      %p190 = scmp.ne.s32.totalorder %s179, %s182
      %p191 = scmp.eq.s32.totalorder %s22, 1
      %p192 = por %p190, %p191
      %p193 = scmp.ne.s32.totalorder %s182, %s183
      %p194 = scmp.eq.s32.totalorder %s22, 0
      %p195 = por %p193, %p194
      %p196 = scmp.ne.s32.totalorder %s182, %s183
      %p197 = scmp.eq.s32.totalorder %s23, 1
      %p198 = por %p196, %p197
      %p200 = scmp.ne.s32.totalorder %s183, %s199
      %p201 = scmp.eq.s32.totalorder %s23, 0
      %p202 = por %p200, %p201
      %p203 = scmp.le.s32.totalorder 1, %s17
      %p204 = scmp.lt.s32.totalorder %s17, 3
      %p205 = pnand %p203, %p204
      %p206 = pneg %p205
      // Predicated region
      $region9: #{tpu_custom_call.1} parent=5 // pred_check
        _
      $region10: #{tpu_custom_call.1} parent=5 // pred_check_branch
        %208 = sbr.rel (%p205) target = $region12
      $region11: #{tpu_custom_call.1} parent=5 // pred_region
        %s209 = ssub.s32 %s17, 1
        // Predicated region
        $region13: #{tpu_custom_call.1} parent=11 // pred_check
          %p210 = pneg %p64
        $region14: #{tpu_custom_call.1} parent=11 // pred_check_branch
          %212 = sbr.rel (%p210) target = $region16
        $region15: #{tpu_custom_call.1} parent=11 // pred_region
          _
        $region16: #{tpu_custom_call.1} parent=11 // pred_fallthru
          _
        // Predicated region
        $region17: #{tpu_custom_call.1} parent=11 // pred_check
          %p213 = pneg %p85
        $region18: #{tpu_custom_call.1} parent=11 // pred_check_branch
          %215 = sbr.rel (%p213) target = $region20
        $region19: #{tpu_custom_call.1} parent=11 // pred_region
          _
        $region20: #{tpu_custom_call.1} parent=11 // pred_fallthru
          _
        // Predicated region
        $region21: #{tpu_custom_call.1} parent=11 // pred_check
          %p216 = pneg %p106
        $region22: #{tpu_custom_call.1} parent=11 // pred_check_branch
          %218 = sbr.rel (%p216) target = $region24
        $region23: #{tpu_custom_call.1} parent=11 // pred_region
          _
        $region24: #{tpu_custom_call.1} parent=11 // pred_fallthru
          _
        // Predicated region
        $region25: #{tpu_custom_call.1} parent=11 // pred_check
          %p219 = pneg %p127
        $region26: #{tpu_custom_call.1} parent=11 // pred_check_branch
          %221 = sbr.rel (%p219) target = $region28
        $region27: #{tpu_custom_call.1} parent=11 // pred_region
          _
        $region28: #{tpu_custom_call.1} parent=11 // pred_fallthru
          _
        // Predicated region
        $region29: #{tpu_custom_call.1} parent=11 // pred_check
          %p222 = pneg %p148
        $region30: #{tpu_custom_call.1} parent=11 // pred_check_branch
          %224 = sbr.rel (%p222) target = $region32
        $region31: #{tpu_custom_call.1} parent=11 // pred_region
          _
        $region32: #{tpu_custom_call.1} parent=11 // pred_fallthru
          _
        // Predicated region
        $region33: #{tpu_custom_call.1} parent=11 // pred_check
          %p225 = pneg %p169
        $region34: #{tpu_custom_call.1} parent=11 // pred_check_branch
          %227 = sbr.rel (%p225) target = $region36
        $region35: #{tpu_custom_call.1} parent=11 // pred_region
          %s229 = ssub.s32 16, 16
          %230 = vsyncadd [#allocation4], %s229
          %s232 = sshll.u32 %s6, 4
          %s233 = int_to_ptr.vmem [resolvable:$true] %s232
          %235 = dma.vmem_to_smem %s233, 16, [#allocation2], [#allocation4]
        $region36: #{tpu_custom_call.1} parent=11 // pred_fallthru
          _
      $region12: #{tpu_custom_call.1} parent=5 // pred_fallthru
        _
      %p236 = scmp.lt.s32.totalorder %s17, 2
      // Predicated region
      $region37: #{tpu_custom_call.1} parent=5 // pred_check
        %p237 = pneg %p236
      $region38: #{tpu_custom_call.1} parent=5 // pred_check_branch
        %239 = sbr.rel (%p237) target = $region40
      $region39: #{tpu_custom_call.1} parent=5 // pred_region
        // Predicated region
        $region41: #{tpu_custom_call.1} parent=39 // pred_check
          %p240 = pneg %p37
        $region42: #{tpu_custom_call.1} parent=39 // pred_check_branch
          %242 = sbr.rel (%p240) target = $region44
        $region43: #{tpu_custom_call.1} parent=39 // pred_region
          %p243 = scmp.lt.s32.totalorder %s17, 1
          %s244 = scalar_select %p243, %s17, 1
          %s245 = smul.addr %s244, 2
          %s246 = smul.addr %s245, 8
          %s247 = scalar_lea.vmem %s0, %s246
        $region44: #{tpu_custom_call.1} parent=39 // pred_fallthru
          _
      $region40: #{tpu_custom_call.1} parent=5 // pred_fallthru
        _
      %p248 = scmp.le.s32.totalorder 1, %s17
      %p249 = scmp.lt.s32.totalorder %s17, 3
      %p250 = pnand %p248, %p249
      %p251 = pneg %p250
      // Predicated region
      $region45: #{tpu_custom_call.1} parent=5 // pred_check
        _
      $region46: #{tpu_custom_call.1} parent=5 // pred_check_branch
        %253 = sbr.rel (%p250) target = $region48
      $region47: #{tpu_custom_call.1} parent=5 // pred_region
        %s254 = ssub.s32 %s17, 1
        // Predicated region
        $region49: #{tpu_custom_call.1} parent=47 // pred_check
          %p255 = pneg %p169
        $region50: #{tpu_custom_call.1} parent=47 // pred_check_branch
          %257 = sbr.rel (%p255) target = $region52
        $region51: #{tpu_custom_call.1} parent=47 // pred_region
          %258 = dma.done [#allocation4], 16
        $region52: #{tpu_custom_call.1} parent=47 // pred_fallthru
          _
        %259 = sfence
        %p260 = scmp.lt.s32.totalorder %s22, 1
        %s261 = scalar_select %p260, %s22, 1
        %s262 = smul.addr %s261, 2
        %s263 = smul.addr %s262, 8
        %s264 = scalar_lea.vmem %s0, %s263
        %p265 = pneg %p43
        %p266 = pneg %p40
        %p267 = pneg %p64
        %p268 = pneg %p61
        %p269 = pneg %p85
        %p270 = pneg %p82
        %p271 = pneg %p106
        %p272 = pneg %p103
        %p273 = pneg %p127
        %p274 = pneg %p124
        %p275 = pneg %p148
        %p276 = pneg %p145
        %p277 = pneg %p169
        %p278 = pneg %p166
        %p279 = pneg %p195
        %p280 = pneg %p192
        %s281 = sand.u32 %s182, 1
        %s282 = scalar_lea.sflag [#allocation3], %s281
        %s283 = sand.u32 %s182, 1
        %s284 = smul.addr %s283, 16
        %s285 = scalar_lea.vmem [#allocation5], %s284
        %p286 = scmp.lt.s32.totalorder %s22, 1
        %s287 = scalar_select %p286, %s22, 1
        %s288 = smul.addr %s287, 2
        %s289 = smul.addr %s288, 8
        %s290 = scalar_lea.vmem %s0, %s289
        %v291 = vld [vmem:[%s290] sm:$0xff]
        %v292 = vld [vmem:[%s290 + $0x8] sm:$0xff]
        %s293 = sld [smem:[#allocation2]]
        %s294 = sld [smem:[#allocation2 + $0x1]]
        %s295 = sld [smem:[#allocation2 + $0x2]]
        %v296 = vld [vmem:[%s4] sm:$0xff]
        %v297 = vld [vmem:[%s4 + $0x8] sm:$0xff]
        %v298 = vld [vmem:[%s4 + $0x10] sm:$0xff]
        %v299 = vld [vmem:[%s4 + $0x18] sm:$0xff]
        %v300 = vld [vmem:[%s5] sm:$0xff]
        %v301 = vld [vmem:[%s5 + $0x8] sm:$0xff]
        %v302 = vld [vmem:[%s1] sm:$0xff]
        %v303 = vld [vmem:[%s1 + $0x8] sm:$0xff]
        %v304 = vld [vmem:[%s1 + $0x10] sm:$0xff]
        %v305 = vld [vmem:[%s1 + $0x18] sm:$0xff]
        %307 = vset.pattern.permute.xlu0 0
        %308 = vperm.xlu0 %307, %v296
        %v309 = vpop.permute.xlu0 %308
        %312 = vset.pattern.permute.xlu0 0
        %313 = vperm.xlu0 %312, %v297
        %v314 = vpop.permute.xlu0 %313
        %317 = vset.pattern.permute.xlu0 0
        %318 = vperm.xlu0 %317, %v298
        %v319 = vpop.permute.xlu0 %318
        %322 = vset.pattern.permute.xlu0 0
        %323 = vperm.xlu0 %322, %v299
        %v324 = vpop.permute.xlu0 %323
        %vm326 = vcmask 130048
        %v328 = vsel %vm326, %v302, 0
        %v331 = vsel %vm326, %v303, 0
        %v334 = vsel %vm326, %v304, 0
        %v337 = vsel %vm326, %v305, 0
        %339 = vmatprep.subr.mxu0 0.0
        %340 = vmatpush1.msra.mxu0 %v291
        %341 = vmatprep.subr.mxu0 0.0
        %342 = vmatpush1.msra.mxu0 %v292
        %343 = vmatprep.subr.mxu0 0.0
        %344 = vmatpush1.msra.mxu0 0.0
        %345 = vmatprep.subr.mxu0 0.0
        %346 = vmatpush1.msra.mxu0 0.0
        %347 = vmatprep.subr.mxu0 0.0
        %348 = vmatpush1.msra.mxu0 0.0
        %349 = vmatprep.subr.mxu0 0.0
        %350 = vmatpush1.msra.mxu0 0.0
        %351 = vmatprep.subr.mxu0 0.0
        %352 = vmatpush1.msra.mxu0 0.0
        %353 = vmatprep.subr.mxu0 0.0
        %354 = vmatpush1.msra.mxu0 0.0
        %355 = vmatprep.subr.mxu0 0.0
        %356 = vmatpush1.msra.mxu0 0.0
        %357 = vmatprep.subr.mxu0 0.0
        %358 = vmatpush1.msra.mxu0 0.0
        %359 = vmatprep.subr.mxu0 0.0
        %360 = vmatpush1.msra.mxu0 0.0
        %361 = vmatprep.subr.mxu0 0.0
        %362 = vmatpush1.msra.mxu0 0.0
        %363 = vmatprep.subr.mxu0 0.0
        %364 = vmatpush1.msra.mxu0 0.0
        %365 = vmatprep.subr.mxu0 0.0
        %366 = vmatpush1.msra.mxu0 0.0
        %367 = vmatprep.subr.mxu0 0.0
        %368 = vmatpush1.msra.mxu0 0.0
        %369 = vmatprep.subr.mxu0 0.0
        %370 = vmatpush1.msra.mxu0 0.0
        %371 = vmatprep.subr.mxu0 0.0
        %372 = vmatpush1.msra.mxu0 0.0
        %373 = vmatprep.subr.mxu0 0.0
        %374 = vmatpush1.msra.mxu0 0.0
        %375 = vmatprep.subr.mxu0 0.0
        %376 = vmatpush1.msra.mxu0 0.0
        %377 = vmatprep.subr.mxu0 0.0
        %378 = vmatpush1.msra.mxu0 0.0
        %379 = vmatprep.subr.mxu0 0.0
        %380 = vmatpush1.msra.mxu0 0.0
        %381 = vmatprep.subr.mxu0 0.0
        %382 = vmatpush1.msra.mxu0 0.0
        %383 = vmatprep.subr.mxu0 0.0
        %384 = vmatpush1.msra.mxu0 0.0
        %385 = vmatprep.subr.mxu0 0.0
        %386 = vmatpush1.msra.mxu0 0.0
        %387 = vmatprep.subr.mxu0 0.0
        %388 = vmatpush1.msra.mxu0 0.0
        %389 = vmatprep.subr.mxu0 0.0
        %390 = vmatpush1.msra.mxu0 0.0
        %391 = vmatprep.subr.mxu0 0.0
        %392 = vmatpush1.msra.mxu0 0.0
        %393 = vmatprep.subr.mxu0 0.0
        %394 = vmatpush1.msra.mxu0 0.0
        %395 = vmatprep.subr.mxu0 0.0
        %396 = vmatpush1.msra.mxu0 0.0
        %397 = vmatprep.subr.mxu0 0.0
        %398 = vmatpush1.msra.mxu0 0.0
        %399 = vmatprep.subr.mxu0 0.0
        %400 = vmatpush1.msra.mxu0 0.0
        %401 = vmatprep.subr.mxu0 0.0
        %402 = vmatpush1.msra.mxu0 0.0
        %403 = vmatprep.mubr.f32.mxu0 0.0
        %404 = vmatmul.mubr.f32.gmra.mrb[0].mxu0 %v328
        %v405 = vpop.f32.mrb[0].mxu0
        %v406 = vadd.f32 %v309, %v405
        %v407 = vpop.f32.mrb[0].mxu0
        %408 = vmatprep.mubr.f32.mxu0 0.0
        %409 = vmatmul.mubr.f32.gmra.mrb[0].mxu0 %v331
        %v410 = vpop.f32.mrb[0].mxu0
        %v411 = vadd.f32 %v314, %v410
        %v412 = vpop.f32.mrb[0].mxu0
        %413 = vmatprep.mubr.f32.mxu0 0.0
        %414 = vmatmul.mubr.f32.gmra.mrb[0].mxu0 %v334
        %v415 = vpop.f32.mrb[0].mxu0
        %v416 = vadd.f32 %v319, %v415
        %v417 = vpop.f32.mrb[0].mxu0
        %418 = vmatprep.mubr.f32.mxu0 0.0
        %419 = vmatmul.mubr.f32.gmra.mrb[0].mxu0 %v337
        %v420 = vpop.f32.mrb[0].mxu0
        %v421 = vadd.f32 %v324, %v420
        %v422 = vpop.f32.mrb[0].mxu0
        %423 = vdwg.mxu0
        %v424 = vadd.f32 %v406, %v411
        %v425 = vadd.f32 %v424, %v416
        %v426 = vadd.f32 %v425, %v421
        %427 = vadd.xlane.f32.xlu0 %v426
        %v428 = vpop.xlane.xlu0 %427
        %v429 = vrot.slane %v428, 4
        %v430 = vadd.f32 %v428, %v429
        %v431 = vrot.slane %v430, 2
        %v432 = vadd.f32 %v430, %v431
        %v433 = vrot.slane %v432, 1
        %v434 = vadd.f32 %v432, %v433
        %s435 = vtos %v434
        %v436 = vrcp.pop 4096.0
        %s437 = vtos %v436
        %s438 = smul.f32 %s435, %s437
        %v439 = vstv %s438
        %v440 = vsub.f32 %v406, %v439
        %v441 = vsub.f32 %v411, %v439
        %v442 = vsub.f32 %v416, %v439
        %v443 = vsub.f32 %v421, %v439
        %v444 = vmul.f32 %v440, %v440
        %v445 = vmul.f32 %v441, %v441
        %v446 = vmul.f32 %v442, %v442
        %v447 = vmul.f32 %v443, %v443
        %v448 = vadd.f32 %v444, %v445
        %v449 = vadd.f32 %v448, %v446
        %v450 = vadd.f32 %v449, %v447
        %451 = vadd.xlane.f32.xlu0 %v450
        %v452 = vpop.xlane.xlu0 %451
        %v453 = vrot.slane %v452, 4
        %v454 = vadd.f32 %v452, %v453
        %v455 = vrot.slane %v454, 2
        %v456 = vadd.f32 %v454, %v455
        %v457 = vrot.slane %v456, 1
        %v458 = vadd.f32 %v456, %v457
        %s459 = vtos %v458
        %v460 = vrcp.pop 4096.0
        %s461 = vtos %v460
        %s462 = smul.f32 %s459, %s461
        %s463 = sadd.f32 %s462, 1e-08
        %v464 = vstv %s463
        %v465 = vrsqrt.pop %v464
        %s466 = vtos %v465
        %v467 = vstv %s466
        %v468 = vmul.f32 %v440, %v467
        %v469 = vmul.f32 %v441, %v467
        %v470 = vmul.f32 %v442, %v467
        %v471 = vmul.f32 %v443, %v467
        %472 = vset.pattern.permute.xlu0 1
        %473 = vperm.xlu0 %472, %v296
        %v474 = vpop.permute.xlu0 %473
        %476 = vset.pattern.permute.xlu0 1
        %477 = vperm.xlu0 %476, %v297
        %v478 = vpop.permute.xlu0 %477
        %480 = vset.pattern.permute.xlu0 1
        %481 = vperm.xlu0 %480, %v298
        %v482 = vpop.permute.xlu0 %481
        %484 = vset.pattern.permute.xlu0 1
        %485 = vperm.xlu0 %484, %v299
        %v486 = vpop.permute.xlu0 %485
        %v488 = vmul.f32 %v474, %v468
        %v489 = vmul.f32 %v478, %v469
        %v490 = vmul.f32 %v482, %v470
        %v491 = vmul.f32 %v486, %v471
        %492 = vset.pattern.permute.xlu0 2
        %493 = vperm.xlu0 %492, %v296
        %v494 = vpop.permute.xlu0 %493
        %496 = vset.pattern.permute.xlu0 2
        %497 = vperm.xlu0 %496, %v297
        %v498 = vpop.permute.xlu0 %497
        %500 = vset.pattern.permute.xlu0 2
        %501 = vperm.xlu0 %500, %v298
        %v502 = vpop.permute.xlu0 %501
        %504 = vset.pattern.permute.xlu0 2
        %505 = vperm.xlu0 %504, %v299
        %v506 = vpop.permute.xlu0 %505
        %v508 = vadd.f32 %v488, %v494
        %v509 = vadd.f32 %v489, %v498
        %v510 = vadd.f32 %v490, %v502
        %v511 = vadd.f32 %v491, %v506
        %vm512 = vcmp.gt.f32.partialorder %v508, 0.0
        %vm513 = vcmp.gt.f32.partialorder %v509, 0.0
        %vm514 = vcmp.gt.f32.partialorder %v510, 0.0
        %vm515 = vcmp.gt.f32.partialorder %v511, 0.0
        %v516 = vstv %s293
        %v517 = vmul.f32 %v516, %v508
        %v518 = vmul.f32 %v516, %v509
        %v519 = vmul.f32 %v516, %v510
        %v520 = vmul.f32 %v516, %v511
        %v521 = vsel %vm512, %v508, %v517
        %v522 = vsel %vm513, %v509, %v518
        %v523 = vsel %vm514, %v510, %v519
        %v524 = vsel %vm515, %v511, %v520
        %v525 = vld [vmem:[%s2] sm:$0xff]
        %v526 = vld [vmem:[%s2 + $0x8] sm:$0xff]
        %v527 = vld [vmem:[%s2 + $0x10] sm:$0xff]
        %v528 = vld [vmem:[%s2 + $0x18] sm:$0xff]
        %v529 = vlaneseq
        %v530 = vand.u32 %v529, 127
        %531 = vrot.lane.b32.xlu0 %v521, 2
        %v532 = vpop.permute.xlu0 %531
        %533 = vrot.lane.b32.xlu0 %v522, 2
        %v534 = vpop.permute.xlu0 %533
        %535 = vrot.lane.b32.xlu0 %v523, 2
        %v536 = vpop.permute.xlu0 %535
        %537 = vrot.lane.b32.xlu0 %v524, 2
        %v538 = vpop.permute.xlu0 %537
        %vm539 = vcmp.ge.s32.totalorder %v530, 2
        %v540 = vsel %vm539, 1, 0
        %v541 = vcvt.s32.f32 %v540
        %v542 = vmul.f32 %v532, %v541
        %v543 = vmul.f32 %v534, %v541
        %v544 = vmul.f32 %v536, %v541
        %v545 = vmul.f32 %v538, %v541
        %547 = vset.pattern.permute.xlu0 0
        %548 = vperm.xlu0 %547, %v525
        %v549 = vpop.permute.xlu0 %548
        %552 = vset.pattern.permute.xlu0 0
        %553 = vperm.xlu0 %552, %v526
        %v554 = vpop.permute.xlu0 %553
        %557 = vset.pattern.permute.xlu0 0
        %558 = vperm.xlu0 %557, %v527
        %v559 = vpop.permute.xlu0 %558
        %562 = vset.pattern.permute.xlu0 0
        %563 = vperm.xlu0 %562, %v528
        %v564 = vpop.permute.xlu0 %563
        %v566 = vmul.f32 %v549, %v542
        %v567 = vmul.f32 %v554, %v543
        %v568 = vmul.f32 %v559, %v544
        %v569 = vmul.f32 %v564, %v545
        %v570 = vadd.f32 %v566, 0.0
        %v571 = vadd.f32 %v567, 0.0
        %v572 = vadd.f32 %v568, 0.0
        %v573 = vadd.f32 %v569, 0.0
        %574 = vrot.lane.b32.xlu0 %v521, 1
        %v575 = vpop.permute.xlu0 %574
        %576 = vrot.lane.b32.xlu0 %v522, 1
        %v577 = vpop.permute.xlu0 %576
        %578 = vrot.lane.b32.xlu0 %v523, 1
        %v579 = vpop.permute.xlu0 %578
        %580 = vrot.lane.b32.xlu0 %v524, 1
        %v581 = vpop.permute.xlu0 %580
        %vm582 = vcmp.ge.s32.totalorder %v530, 1
        %v583 = vsel %vm582, 1, 0
        %v584 = vcvt.s32.f32 %v583
        %v585 = vmul.f32 %v575, %v584
        %v586 = vmul.f32 %v577, %v584
        %v587 = vmul.f32 %v579, %v584
        %v588 = vmul.f32 %v581, %v584
        %589 = vset.pattern.permute.xlu0 1
        %590 = vperm.xlu0 %589, %v525
        %v591 = vpop.permute.xlu0 %590
        %593 = vset.pattern.permute.xlu0 1
        %594 = vperm.xlu0 %593, %v526
        %v595 = vpop.permute.xlu0 %594
        %597 = vset.pattern.permute.xlu0 1
        %598 = vperm.xlu0 %597, %v527
        %v599 = vpop.permute.xlu0 %598
        %601 = vset.pattern.permute.xlu0 1
        %602 = vperm.xlu0 %601, %v528
        %v603 = vpop.permute.xlu0 %602
        %v605 = vmul.f32 %v591, %v585
        %v606 = vmul.f32 %v595, %v586
        %v607 = vmul.f32 %v599, %v587
        %v608 = vmul.f32 %v603, %v588
        %v609 = vadd.f32 %v570, %v605
        %v610 = vadd.f32 %v571, %v606
        %v611 = vadd.f32 %v572, %v607
        %v612 = vadd.f32 %v573, %v608
        %613 = vset.pattern.permute.xlu0 2
        %614 = vperm.xlu0 %613, %v525
        %v615 = vpop.permute.xlu0 %614
        %617 = vset.pattern.permute.xlu0 2
        %618 = vperm.xlu0 %617, %v526
        %v619 = vpop.permute.xlu0 %618
        %621 = vset.pattern.permute.xlu0 2
        %622 = vperm.xlu0 %621, %v527
        %v623 = vpop.permute.xlu0 %622
        %625 = vset.pattern.permute.xlu0 2
        %626 = vperm.xlu0 %625, %v528
        %v627 = vpop.permute.xlu0 %626
        %v629 = vmul.f32 %v615, %v521
        %v630 = vmul.f32 %v619, %v522
        %v631 = vmul.f32 %v623, %v523
        %v632 = vmul.f32 %v627, %v524
        %v633 = vadd.f32 %v609, %v629
        %v634 = vadd.f32 %v610, %v630
        %v635 = vadd.f32 %v611, %v631
        %v636 = vadd.f32 %v612, %v632
        %637 = vrot.lane.b32.xlu0 %v521, 127
        %v638 = vpop.permute.xlu0 %637
        %639 = vrot.lane.b32.xlu0 %v522, 127
        %v640 = vpop.permute.xlu0 %639
        %641 = vrot.lane.b32.xlu0 %v523, 127
        %v642 = vpop.permute.xlu0 %641
        %643 = vrot.lane.b32.xlu0 %v524, 127
        %v644 = vpop.permute.xlu0 %643
        %vm645 = vcmp.lt.s32.totalorder %v530, 127
        %v646 = vsel %vm645, 1, 0
        %v647 = vcvt.s32.f32 %v646
        %v648 = vmul.f32 %v638, %v647
        %v649 = vmul.f32 %v640, %v647
        %v650 = vmul.f32 %v642, %v647
        %v651 = vmul.f32 %v644, %v647
        %652 = vset.pattern.permute.xlu0 3
        %653 = vperm.xlu0 %652, %v525
        %v654 = vpop.permute.xlu0 %653
        %656 = vset.pattern.permute.xlu0 3
        %657 = vperm.xlu0 %656, %v526
        %v658 = vpop.permute.xlu0 %657
        %660 = vset.pattern.permute.xlu0 3
        %661 = vperm.xlu0 %660, %v527
        %v662 = vpop.permute.xlu0 %661
        %664 = vset.pattern.permute.xlu0 3
        %665 = vperm.xlu0 %664, %v528
        %v666 = vpop.permute.xlu0 %665
        %v668 = vmul.f32 %v654, %v648
        %v669 = vmul.f32 %v658, %v649
        %v670 = vmul.f32 %v662, %v650
        %v671 = vmul.f32 %v666, %v651
        %v672 = vadd.f32 %v633, %v668
        %v673 = vadd.f32 %v634, %v669
        %v674 = vadd.f32 %v635, %v670
        %v675 = vadd.f32 %v636, %v671
        %676 = vrot.lane.b32.xlu0 %v521, 126
        %v677 = vpop.permute.xlu0 %676
        %678 = vrot.lane.b32.xlu0 %v522, 126
        %v679 = vpop.permute.xlu0 %678
        %680 = vrot.lane.b32.xlu0 %v523, 126
        %v681 = vpop.permute.xlu0 %680
        %682 = vrot.lane.b32.xlu0 %v524, 126
        %v683 = vpop.permute.xlu0 %682
        %vm684 = vcmp.lt.s32.totalorder %v530, 126
        %v685 = vsel %vm684, 1, 0
        %v686 = vcvt.s32.f32 %v685
        %v687 = vmul.f32 %v677, %v686
        %v688 = vmul.f32 %v679, %v686
        %v689 = vmul.f32 %v681, %v686
        %v690 = vmul.f32 %v683, %v686
        %691 = vset.pattern.permute.xlu0 4
        %692 = vperm.xlu0 %691, %v525
        %v693 = vpop.permute.xlu0 %692
        %695 = vset.pattern.permute.xlu0 4
        %696 = vperm.xlu0 %695, %v526
        %v697 = vpop.permute.xlu0 %696
        %699 = vset.pattern.permute.xlu0 4
        %700 = vperm.xlu0 %699, %v527
        %v701 = vpop.permute.xlu0 %700
        %703 = vset.pattern.permute.xlu0 4
        %704 = vperm.xlu0 %703, %v528
        %v705 = vpop.permute.xlu0 %704
        %v707 = vmul.f32 %v693, %v687
        %v708 = vmul.f32 %v697, %v688
        %v709 = vmul.f32 %v701, %v689
        %v710 = vmul.f32 %v705, %v690
        %v711 = vadd.f32 %v672, %v707
        %v712 = vadd.f32 %v673, %v708
        %v713 = vadd.f32 %v674, %v709
        %v714 = vadd.f32 %v675, %v710
        %715 = vset.pattern.permute.xlu0 3
        %716 = vperm.xlu0 %715, %v296
        %v717 = vpop.permute.xlu0 %716
        %719 = vset.pattern.permute.xlu0 3
        %720 = vperm.xlu0 %719, %v297
        %v721 = vpop.permute.xlu0 %720
        %723 = vset.pattern.permute.xlu0 3
        %724 = vperm.xlu0 %723, %v298
        %v725 = vpop.permute.xlu0 %724
        %727 = vset.pattern.permute.xlu0 3
        %728 = vperm.xlu0 %727, %v299
        %v729 = vpop.permute.xlu0 %728
        %v731 = vadd.f32 %v711, %v717
        %v732 = vadd.f32 %v712, %v721
        %v733 = vadd.f32 %v713, %v725
        %v734 = vadd.f32 %v714, %v729
        %v735 = vadd.f32 %v731, %v732
        %v736 = vadd.f32 %v735, %v733
        %v737 = vadd.f32 %v736, %v734
        %738 = vadd.xlane.f32.xlu0 %v737
        %v739 = vpop.xlane.xlu0 %738
        %v740 = vrot.slane %v739, 4
        %v741 = vadd.f32 %v739, %v740
        %v742 = vrot.slane %v741, 2
        %v743 = vadd.f32 %v741, %v742
        %v744 = vrot.slane %v743, 1
        %v745 = vadd.f32 %v743, %v744
        %s746 = vtos %v745
        %v747 = vrcp.pop 4096.0
        %s748 = vtos %v747
        %s749 = smul.f32 %s746, %s748
        %v750 = vstv %s749
        %v751 = vsub.f32 %v731, %v750
        %v752 = vsub.f32 %v732, %v750
        %v753 = vsub.f32 %v733, %v750
        %v754 = vsub.f32 %v734, %v750
        %v755 = vmul.f32 %v751, %v751
        %v756 = vmul.f32 %v752, %v752
        %v757 = vmul.f32 %v753, %v753
        %v758 = vmul.f32 %v754, %v754
        %v759 = vadd.f32 %v755, %v756
        %v760 = vadd.f32 %v759, %v757
        %v761 = vadd.f32 %v760, %v758
        %762 = vadd.xlane.f32.xlu0 %v761
        %v763 = vpop.xlane.xlu0 %762
        %v764 = vrot.slane %v763, 4
        %v765 = vadd.f32 %v763, %v764
        %v766 = vrot.slane %v765, 2
        %v767 = vadd.f32 %v765, %v766
        %v768 = vrot.slane %v767, 1
        %v769 = vadd.f32 %v767, %v768
        %s770 = vtos %v769
        %v771 = vrcp.pop 4096.0
        %s772 = vtos %v771
        %s773 = smul.f32 %s770, %s772
        %s774 = sadd.f32 %s773, 1e-08
        %v775 = vstv %s774
        %v776 = vrsqrt.pop %v775
        %s777 = vtos %v776
        %v778 = vstv %s777
        %v779 = vmul.f32 %v751, %v778
        %v780 = vmul.f32 %v752, %v778
        %v781 = vmul.f32 %v753, %v778
        %v782 = vmul.f32 %v754, %v778
        %783 = vset.pattern.permute.xlu0 4
        %784 = vperm.xlu0 %783, %v296
        %v785 = vpop.permute.xlu0 %784
        %787 = vset.pattern.permute.xlu0 4
        %788 = vperm.xlu0 %787, %v297
        %v789 = vpop.permute.xlu0 %788
        %791 = vset.pattern.permute.xlu0 4
        %792 = vperm.xlu0 %791, %v298
        %v793 = vpop.permute.xlu0 %792
        %795 = vset.pattern.permute.xlu0 4
        %796 = vperm.xlu0 %795, %v299
        %v797 = vpop.permute.xlu0 %796
        %v799 = vmul.f32 %v785, %v779
        %v800 = vmul.f32 %v789, %v780
        %v801 = vmul.f32 %v793, %v781
        %v802 = vmul.f32 %v797, %v782
        %803 = vset.pattern.permute.xlu0 5
        %804 = vperm.xlu0 %803, %v296
        %v805 = vpop.permute.xlu0 %804
        %807 = vset.pattern.permute.xlu0 5
        %808 = vperm.xlu0 %807, %v297
        %v809 = vpop.permute.xlu0 %808
        %811 = vset.pattern.permute.xlu0 5
        %812 = vperm.xlu0 %811, %v298
        %v813 = vpop.permute.xlu0 %812
        %815 = vset.pattern.permute.xlu0 5
        %816 = vperm.xlu0 %815, %v299
        %v817 = vpop.permute.xlu0 %816
        %v819 = vadd.f32 %v799, %v805
        %v820 = vadd.f32 %v800, %v809
        %v821 = vadd.f32 %v801, %v813
        %v822 = vadd.f32 %v802, %v817
        %vm823 = vcmp.gt.f32.partialorder %v819, 0.0
        %vm824 = vcmp.gt.f32.partialorder %v820, 0.0
        %vm825 = vcmp.gt.f32.partialorder %v821, 0.0
        %vm826 = vcmp.gt.f32.partialorder %v822, 0.0
        %v827 = vstv %s294
        %v828 = vmul.f32 %v827, %v819
        %v829 = vmul.f32 %v827, %v820
        %v830 = vmul.f32 %v827, %v821
        %v831 = vmul.f32 %v827, %v822
        %v832 = vsel %vm823, %v819, %v828
        %v833 = vsel %vm824, %v820, %v829
        %v834 = vsel %vm825, %v821, %v830
        %v835 = vsel %vm826, %v822, %v831
        %v836 = vld [vmem:[%s3] sm:$0xff]
        %v837 = vld [vmem:[%s3 + $0x8] sm:$0xff]
        %839 = vset.pattern.permute.xlu0 0
        %840 = vperm.xlu0 %839, %v300
        %v841 = vpop.permute.xlu0 %840
        %844 = vset.pattern.permute.xlu0 0
        %845 = vperm.xlu0 %844, %v301
        %v846 = vpop.permute.xlu0 %845
        %vm848 = vcmask 261120
        %v850 = vsel %vm848, %v836, 0
        %v853 = vsel %vm848, %v837, 0
        %855 = vmatprep.subr.mxu0 0.0
        %856 = vmatpush1.msra.mxu0 %v832
        %857 = vmatprep.subr.mxu0 0.0
        %858 = vmatpush1.msra.mxu0 %v833
        %859 = vmatprep.subr.mxu0 0.0
        %860 = vmatpush1.msra.mxu0 %v834
        %861 = vmatprep.subr.mxu0 0.0
        %862 = vmatpush1.msra.mxu0 %v835
        %863 = vmatprep.subr.mxu0 0.0
        %864 = vmatpush1.msra.mxu0 0.0
        %865 = vmatprep.subr.mxu0 0.0
        %866 = vmatpush1.msra.mxu0 0.0
        %867 = vmatprep.subr.mxu0 0.0
        %868 = vmatpush1.msra.mxu0 0.0
        %869 = vmatprep.subr.mxu0 0.0
        %870 = vmatpush1.msra.mxu0 0.0
        %871 = vmatprep.subr.mxu0 0.0
        %872 = vmatpush1.msra.mxu0 0.0
        %873 = vmatprep.subr.mxu0 0.0
        %874 = vmatpush1.msra.mxu0 0.0
        %875 = vmatprep.subr.mxu0 0.0
        %876 = vmatpush1.msra.mxu0 0.0
        %877 = vmatprep.subr.mxu0 0.0
        %878 = vmatpush1.msra.mxu0 0.0
        %879 = vmatprep.subr.mxu0 0.0
        %880 = vmatpush1.msra.mxu0 0.0
        %881 = vmatprep.subr.mxu0 0.0
        %882 = vmatpush1.msra.mxu0 0.0
        %883 = vmatprep.subr.mxu0 0.0
        %884 = vmatpush1.msra.mxu0 0.0
        %885 = vmatprep.subr.mxu0 0.0
        %886 = vmatpush1.msra.mxu0 0.0
        %887 = vmatprep.subr.mxu0 0.0
        %888 = vmatpush1.msra.mxu0 0.0
        %889 = vmatprep.subr.mxu0 0.0
        %890 = vmatpush1.msra.mxu0 0.0
        %891 = vmatprep.subr.mxu0 0.0
        %892 = vmatpush1.msra.mxu0 0.0
        %893 = vmatprep.subr.mxu0 0.0
        %894 = vmatpush1.msra.mxu0 0.0
        %895 = vmatprep.subr.mxu0 0.0
        %896 = vmatpush1.msra.mxu0 0.0
        %897 = vmatprep.subr.mxu0 0.0
        %898 = vmatpush1.msra.mxu0 0.0
        %899 = vmatprep.subr.mxu0 0.0
        %900 = vmatpush1.msra.mxu0 0.0
        %901 = vmatprep.subr.mxu0 0.0
        %902 = vmatpush1.msra.mxu0 0.0
        %903 = vmatprep.subr.mxu0 0.0
        %904 = vmatpush1.msra.mxu0 0.0
        %905 = vmatprep.subr.mxu0 0.0
        %906 = vmatpush1.msra.mxu0 0.0
        %907 = vmatprep.subr.mxu0 0.0
        %908 = vmatpush1.msra.mxu0 0.0
        %909 = vmatprep.subr.mxu0 0.0
        %910 = vmatpush1.msra.mxu0 0.0
        %911 = vmatprep.subr.mxu0 0.0
        %912 = vmatpush1.msra.mxu0 0.0
        %913 = vmatprep.subr.mxu0 0.0
        %914 = vmatpush1.msra.mxu0 0.0
        %915 = vmatprep.subr.mxu0 0.0
        %916 = vmatpush1.msra.mxu0 0.0
        %917 = vmatprep.subr.mxu0 0.0
        %918 = vmatpush1.msra.mxu0 0.0
        %919 = vmatprep.mubr.f32.mxu0 0.0
        %920 = vmatmul.mubr.f32.gmra.mrb[0].mxu0 %v850
        %v921 = vpop.f32.mrb[0].mxu0
        %v922 = vadd.f32 %v841, %v921
        %v923 = vpop.f32.mrb[0].mxu0
        %924 = vmatprep.mubr.f32.mxu0 0.0
        %925 = vmatmul.mubr.f32.gmra.mrb[0].mxu0 %v853
        %v926 = vpop.f32.mrb[0].mxu0
        %v927 = vadd.f32 %v846, %v926
        %v928 = vpop.f32.mrb[0].mxu0
        %929 = vdwg.mxu0
        %v930 = vadd.f32 %v922, %v927
        %931 = vadd.xlane.f32.xlu0 %v930
        %v932 = vpop.xlane.xlu0 %931
        %v933 = vrot.slane %v932, 4
        %v934 = vadd.f32 %v932, %v933
        %v935 = vrot.slane %v934, 2
        %v936 = vadd.f32 %v934, %v935
        %v937 = vrot.slane %v936, 1
        %v938 = vadd.f32 %v936, %v937
        %s939 = vtos %v938
        %v940 = vrcp.pop 2048.0
        %s941 = vtos %v940
        %s942 = smul.f32 %s939, %s941
        %v943 = vstv %s942
        %v944 = vsub.f32 %v922, %v943
        %v945 = vsub.f32 %v927, %v943
        %v946 = vmul.f32 %v944, %v944
        %v947 = vmul.f32 %v945, %v945
        %v948 = vadd.f32 %v946, %v947
        %949 = vadd.xlane.f32.xlu0 %v948
        %v950 = vpop.xlane.xlu0 %949
        %v951 = vrot.slane %v950, 4
        %v952 = vadd.f32 %v950, %v951
        %v953 = vrot.slane %v952, 2
        %v954 = vadd.f32 %v952, %v953
        %v955 = vrot.slane %v954, 1
        %v956 = vadd.f32 %v954, %v955
        %s957 = vtos %v956
        %v958 = vrcp.pop 2048.0
        %s959 = vtos %v958
        %s960 = smul.f32 %s957, %s959
        %s961 = sadd.f32 %s960, 1e-08
        %v962 = vstv %s961
        %v963 = vrsqrt.pop %v962
        %s964 = vtos %v963
        %v965 = vstv %s964
        %v966 = vmul.f32 %v944, %v965
        %v967 = vmul.f32 %v945, %v965
        %968 = vset.pattern.permute.xlu0 1
        %969 = vperm.xlu0 %968, %v300
        %v970 = vpop.permute.xlu0 %969
        %972 = vset.pattern.permute.xlu0 1
        %973 = vperm.xlu0 %972, %v301
        %v974 = vpop.permute.xlu0 %973
        %v976 = vmul.f32 %v970, %v966
        %v977 = vmul.f32 %v974, %v967
        %978 = vset.pattern.permute.xlu0 2
        %979 = vperm.xlu0 %978, %v300
        %v980 = vpop.permute.xlu0 %979
        %982 = vset.pattern.permute.xlu0 2
        %983 = vperm.xlu0 %982, %v301
        %v984 = vpop.permute.xlu0 %983
        %v986 = vadd.f32 %v976, %v980
        %v987 = vadd.f32 %v977, %v984
        %vm988 = vcmp.gt.f32.partialorder %v986, 0.0
        %vm989 = vcmp.gt.f32.partialorder %v987, 0.0
        %v990 = vstv %s295
        %v991 = vmul.f32 %v990, %v986
        %v992 = vmul.f32 %v990, %v987
        %v993 = vsel %vm988, %v986, %v991
        %v994 = vsel %vm989, %v987, %v992
        %v995 = vadd.f32 %v993, %v291
        %v996 = vadd.f32 %v994, %v292
        %997 = vst [vmem:[%s285] sm:$0xff] %v995
        %998 = vst [vmem:[%s285 + $0x8] sm:$0xff] %v996
        %s999 = sand.u32 %s182, 1
        %s1000 = scalar_lea.sflag [#allocation3], %s999
        %s1001 = sand.u32 %s182, 1
        %s1002 = smul.addr %s1001, 16
        %s1003 = scalar_lea.vmem [#allocation5], %s1002
        // Predicated region
        $region53: #{tpu_custom_call.1} parent=47 // pred_check
          %p1004 = pneg %p192
        $region54: #{tpu_custom_call.1} parent=47 // pred_check_branch
          %1006 = sbr.rel (%p1004) target = $region56
        $region55: #{tpu_custom_call.1} parent=47 // pred_region
          %s1008 = ssub.s32 256, 256
          %1009 = vsyncadd %s1000, %s1008
          %s1010 = smul.addr %s22, 2
          %s1011 = smul.addr %s1010, 128
          %s1012 = scalar_lea.hbm %s7, %s1011
          %s1013 = sshll.u32 %s1003, 4
          %s1014 = int_to_ptr.vmem [resolvable:$true] %s1013
          %1019 = dma.vmem_to_hbm [thread:$0]  %s1014, 256, %s1012, %s1000, 128, 128, 8
        $region56: #{tpu_custom_call.1} parent=47 // pred_fallthru
          _
      $region48: #{tpu_custom_call.1} parent=5 // pred_fallthru
        _
      %p1020 = scmp.le.s32.totalorder 2, %s17
      // Predicated region
      $region57: #{tpu_custom_call.1} parent=5 // pred_check
        %p1021 = pneg %p1020
      $region58: #{tpu_custom_call.1} parent=5 // pred_check_branch
        %1023 = sbr.rel (%p1021) target = $region60
      $region59: #{tpu_custom_call.1} parent=5 // pred_region
        %s1024 = ssub.s32 %s17, 2
        // Predicated region
        $region61: #{tpu_custom_call.1} parent=59 // pred_check
          %p1025 = pneg %p198
        $region62: #{tpu_custom_call.1} parent=59 // pred_check_branch
          %1027 = sbr.rel (%p1025) target = $region64
        $region63: #{tpu_custom_call.1} parent=59 // pred_region
          %s1028 = sand.u32 %s183, 1
          %s1029 = scalar_lea.sflag [#allocation3], %s1028
          %s1030 = sand.u32 %s183, 1
          %s1031 = smul.addr %s1030, 16
          %s1032 = scalar_lea.vmem [#allocation5], %s1031
          %1033 = dma.done %s1029, 256
        $region64: #{tpu_custom_call.1} parent=59 // pred_fallthru
          _
      $region60: #{tpu_custom_call.1} parent=5 // pred_fallthru
        _
    $region6: #{tpu_custom_call.1} parent=1 // loop_footer
      %s21 = sadd.s32 1, %s17
    $region7: #{tpu_custom_call.1} parent=1 // loop_footer_branch
      %16 = sbr.rel target = $region3
    $region8: #{tpu_custom_call.1} parent=1 // loop_exit
      _
    %1034 = vsyncpa [#allocation3], 1
    %s1035 = scalar_lea.sflag [#allocation3], 1
    %1036 = vsyncpa %s1035, 1
    %1037 = vsyncpa [#allocation4], 1
    %s1038 = scalar_lea.sflag [#allocation4], 1
    %1039 = vsyncpa %s1038, 1

</llo_original>
